<compile_context>
chip_gen: v7x
topology: tpu7x:2x2x1
jax: 0.10.0
libtpu: 0.0.40
codegen_flags: <defaults>
</compile_context>

<pallas_src>
import math
from functools import partial

import jax
import jax.numpy as jnp
from jax.experimental import pallas as pl
from jax.experimental.pallas import tpu as pltpu


def _random_layer_kernel(x_ref, w_ref, out_ref, *, n, bn_pad):
    """x_ref: (bm, sum_d) concatenated inputs; w_ref: (sum_d, n*bn_pad)
    block-diagonal weights (scale folded into block 0); out_ref: (bm, bn_pad).

    One MXU matmul (f32 accumulation) followed by an elementwise product of
    the n lane-aligned, output_dim_pad-wide result slices.
    """
    mm = jnp.dot(x_ref[...], w_ref[...], preferred_element_type=jnp.float32)
    acc = mm[:, 0:bn_pad]
    for i in range(1, n):
        acc = acc * mm[:, i * bn_pad:(i + 1) * bn_pad]   # 128-aligned slice
    out_ref[...] = acc.astype(out_ref.dtype)


def _tpu_tuning():
    """Pick vmem limit / megacore preference per TPU generation."""
    vmem_cap = None
    try:
        info = pltpu.get_tpu_info()
        vmem_cap = int(getattr(info, "vmem_capacity_bytes", 0)) or None
    except Exception:
        vmem_cap = None
    if vmem_cap is None:
        try:
            kind = jax.devices()[0].device_kind.lower()
        except Exception:
            kind = ""
        if "v5" in kind or "v6" in kind:
            vmem_cap = 128 * 1024 * 1024
        else:
            vmem_cap = 64 * 1024 * 1024   # conservative (v7x-class / unknown)
    if vmem_cap >= 100 * 1024 * 1024:
        # v5e / v6e: 128 MiB VMEM, single TensorCore -> big tiles, no megacore.
        return {"vmem_limit_bytes": 96 * 1024 * 1024, "prefer_even_tiles": False}
    # v7x-class: 64 MiB / TC, 2 TCs -> keep headroom, balance the two cores.
    return {"vmem_limit_bytes": 48 * 1024 * 1024, "prefer_even_tiles": True}


def random_layer_forward(input_list, random_matrices, *, bm=None,
                         compute_dtype=None, out_dtype=None,
                         vmem_limit_bytes=None):
    """Pallas implementation of RandomLayer.forward.

    input_list:       list of arrays [B, d_i]
    random_matrices:  list of arrays [d_i, output_dim]
    compute_dtype:    matmul operand dtype (e.g. jnp.bfloat16); accumulation
                      is always f32.  bf16 operands/output are a perf option;
                      the relaxed tolerance is inherent operand quantization.
    """
    n = len(input_list)
    assert n == len(random_matrices) and n >= 1
    B = input_list[0].shape[0]
    output_dim = random_matrices[0].shape[1]
    d_list = tuple(int(x.shape[1]) for x in input_list)
    for x, w, d in zip(input_list, random_matrices, d_list):
        assert x.shape == (B, d) and w.shape == (d, output_dim)
    sum_d = sum(d_list)

    compute_dtype = jnp.dtype(compute_dtype or input_list[0].dtype)
    out_dtype = jnp.dtype(out_dtype or input_list[0].dtype)

    tuning = _tpu_tuning()
    if vmem_limit_bytes is None:
        vmem_limit_bytes = tuning["vmem_limit_bytes"]
    prefer_even_tiles = tuning["prefer_even_tiles"]

    # Lane-dense output: pad output_dim up to a multiple of 128 (unmasked vst);
    # the padding is sliced off after the kernel.
    bn_pad = max(128, ((output_dim + 127) // 128) * 128)

    # --- Host-side weight prep ------------------------------------------------
    # Block-diagonal [sum_d, n*bn_pad] weight: W_i at rows off_i, cols i*bn_pad.
    # Scale 1/output_dim**(1/n) folded into block 0 (fixed random buffer).
    scale = 1.0 / math.pow(float(output_dim), 1.0 / n)
    w_big = jnp.zeros((sum_d, n * bn_pad), dtype=jnp.float32)
    off = 0
    for i, (d, w) in enumerate(zip(d_list, random_matrices)):
        w_f32 = jnp.asarray(w, jnp.float32)
        if i == 0:
            w_f32 = w_f32 * scale
        w_big = w_big.at[off:off + d, i * bn_pad:i * bn_pad + output_dim].set(w_f32)
        off += d
    w_big = w_big.astype(compute_dtype)

    # Concatenate the narrow x_i into one dense [B, sum_d] operand: a single
    # contiguous DMA stream per grid step and an intact MXU LHS.
    x_cat = jnp.concatenate([x.astype(compute_dtype) for x in input_list], axis=1)

    # --- Batch-tile selection ---------------------------------------------------
    in_isz = jnp.dtype(compute_dtype).itemsize
    out_isz = jnp.dtype(out_dtype).itemsize
    budget = int(0.85 * vmem_limit_bytes)
    # W is DMA'd once (constant index map): charge it once, not x2.
    w_bytes = sum_d * n * bn_pad * in_isz

    def _tile_bytes(m):
        # double-buffered x tile + double-buffered out tile
        # + f32 matmul result (n*bn_pad wide) + f32 accumulator, charged once.
        return (2 * m * sum_d * in_isz + 2 * m * bn_pad * out_isz
                + m * n * bn_pad * 4 + m * bn_pad * 4)

    if bm is None:
        cands = [c for c in (4096, 2048, 1024, 512, 256, 128, 64, 32, 16, 8)
                 if c <= B and B % c == 0] or [B]
        fitting = [c for c in cands if w_bytes + _tile_bytes(c) <= budget] or [cands[-1]]
        chosen = fitting
        if in_isz < 4:
            # Full sublane packing for bf16 (16) / fp8 (32) operands.
            packed = [c for c in fitting if c % (8 * (4 // in_isz)) == 0]
            if packed:
                chosen = packed
        if prefer_even_tiles:
            # v7x megacore: an even tile count keeps both TensorCores busy.
            even = [c for c in chosen if (B // c) % 2 == 0]
            if even:
                chosen = even
        bm = chosen[0]
    assert B % bm == 0 and (bm == B or bm % 8 == 0)

    grid = (B // bm,)   # degenerate output axis collapsed: 1-D grid

    in_specs = [
        pl.BlockSpec((bm, sum_d), lambda m: (m, 0)),
        # Constant block index -> DMA'd once, VMEM-resident across batch tiles.
        pl.BlockSpec((sum_d, n * bn_pad), lambda m: (0, 0)),
    ]
    out_spec = pl.BlockSpec((bm, bn_pad), lambda m: (m, 0))

    cost = pl.CostEstimate(
        flops=2 * B * sum_d * n * bn_pad + (n - 1) * B * bn_pad,
        transcendentals=0,
        bytes_accessed=(B * sum_d + sum_d * n * bn_pad) * in_isz
                       + B * bn_pad * out_isz)

    out_padded = pl.pallas_call(
        partial(_random_layer_kernel, n=n, bn_pad=bn_pad),
        out_shape=jax.ShapeDtypeStruct((B, bn_pad), out_dtype),
        grid_spec=pltpu.PrefetchScalarGridSpec(
            num_scalar_prefetch=0,
            grid=grid,
            in_specs=in_specs,
            out_specs=out_spec),
        compiler_params=pltpu.CompilerParams(
            dimension_semantics=("parallel",),
            vmem_limit_bytes=vmem_limit_bytes),
        cost_estimate=cost,
    )(x_cat, w_big)

    if bn_pad != output_dim:
        out_padded = out_padded[:, :output_dim]
    return out_padded


def random_layer_reference(input_list, random_matrices):
    """Pure-JAX reference matching the PyTorch forward exactly."""
    n = len(input_list)
    mm = [jnp.dot(x, w) for x, w in zip(input_list, random_matrices)]
    out = mm[0] / math.pow(float(random_matrices[0].shape[1]), 1.0 / n)
    for single in mm[1:]:
        out = out * single
    return out


if __name__ == "__main__":
    key = jax.random.PRNGKey(0)

    # Small shapes consistent with the module: two input streams
    # (e.g. feature [B, 32] and softmax [B, 8]), output_dim = 256.
    B = 8
    input_dim_list = [32, 8]
    output_dim = 256

    keys = jax.random.split(key, 2 * len(input_dim_list))
    random_matrices = [
        jax.random.normal(keys[i], (input_dim_list[i], output_dim), jnp.float32)
        for i in range(len(input_dim_list))
    ]
    input_list = [
        jax.random.normal(keys[len(input_dim_list) + i], (B, input_dim_list[i]),
                          jnp.float32)
        for i in range(len(input_dim_list))
    ]

    ref = random_layer_reference(input_list, random_matrices)

    # f32 path — matches the PyTorch module's math.
    out = jax.block_until_ready(random_layer_forward(input_list, random_matrices))
    assert out.shape == (B, output_dim)
    assert jnp.allclose(out, ref, atol=1e-4, rtol=1e-4), "f32 mismatch vs reference"

    # bf16-operand + bf16-output path — halves the dominant HBM write stream;
    # f32 accumulation keeps numerics close (tolerance is operand quantization,
    # not a kernel defect).
    out_bf16 = jax.block_until_ready(
        random_layer_forward(input_list, random_matrices,
                             compute_dtype=jnp.bfloat16,
                             out_dtype=jnp.bfloat16))
    assert out_bf16.shape == (B, output_dim)
    assert jnp.allclose(out_bf16.astype(jnp.float32), ref, atol=0.5, rtol=0.1), \
        "bf16 mismatch vs reference"

    print("KERNEL_OK")
</pallas_src>

<mosaic_0001>
module attributes {stable_mosaic.version = 11 : i64} {
  func.func @_random_layer_kernel(%arg0: i32, %arg1: memref<8x40xf32, #tpu.memory_space<vmem>>, %arg2: memref<40x512xf32, #tpu.memory_space<vmem>>, %arg3: memref<8x256xf32, #tpu.memory_space<vmem>>) attributes {dimension_semantics = [#tpu.dimension_semantics<parallel>], iteration_bounds = array<i64: 1>, scalar_prefetch = 0 : i64, scratch_operands = 0 : i64, tpu.core_type = #tpu.core_type<tc>, window_params = [{transform_indices = @transform_0, window_bounds = array<i64: 8, 40>}, {pipeline_mode = #tpu.pipeline_mode<synchronous>, transform_indices = @transform_1, window_bounds = array<i64: 40, 512>}, {transform_indices = @transform_2, window_bounds = array<i64: 8, 256>}]} {
    %c0 = arith.constant 0 : index
    %c0_0 = arith.constant 0 : index
    %0 = vector.load %arg1[%c0, %c0_0] : memref<8x40xf32, #tpu.memory_space<vmem>>, vector<8x40xf32>
    %c0_1 = arith.constant 0 : index
    %c0_2 = arith.constant 0 : index
    %1 = vector.load %arg2[%c0_1, %c0_2] : memref<40x512xf32, #tpu.memory_space<vmem>>, vector<40x512xf32>
    %cst = arith.constant dense<0.000000e+00> : vector<8x512xf32>
    %2 = tpu.matmul %0, %1, %cst {dimension_numbers = #tpu.dot_dimension_numbers<[1], [0], [0], [1], [0, 0, 1, 1], [], []>} : vector<8x40xf32>, vector<40x512xf32>, vector<8x512xf32> -> vector<8x512xf32>
    %3 = vector.extract_strided_slice %2 {offsets = [0, 0], sizes = [8, 256], strides = [1, 1]} : vector<8x512xf32> to vector<8x256xf32>
    %4 = vector.extract_strided_slice %2 {offsets = [0, 256], sizes = [8, 256], strides = [1, 1]} : vector<8x512xf32> to vector<8x256xf32>
    %5 = arith.mulf %3, %4 : vector<8x256xf32>
    %c0_3 = arith.constant 0 : index
    %c0_4 = arith.constant 0 : index
    %6 = vector.load %arg3[%c0_3, %c0_4] : memref<8x256xf32, #tpu.memory_space<vmem>>, vector<8x256xf32>
    tpu.vector_store %arg3[%c0_3, %c0_4], %5 {strides = array<i32>} : memref<8x256xf32, #tpu.memory_space<vmem>>, vector<8x256xf32>,
    return
  }
  func.func @transform_0(%arg0: i32) -> (i32, i32) {
    %c0_i32 = arith.constant 0 : i32
    %c0_i32_0 = arith.constant 0 : i32
    return %arg0, %c0_i32 : i32, i32
  }
  func.func @transform_1(%arg0: i32) -> (i32, i32) {
    %c0_i32 = arith.constant 0 : i32
    %c0_i32_0 = arith.constant 0 : i32
    %c0_i32_1 = arith.constant 0 : i32
    return %c0_i32, %c0_i32_0 : i32, i32
  }
  func.func @transform_2(%arg0: i32) -> (i32, i32) {
    %c0_i32 = arith.constant 0 : i32
    %c0_i32_0 = arith.constant 0 : i32
    return %arg0, %c0_i32 : i32, i32
  }
}

</mosaic_0001>

<llo_original>
// kernel: tpu_custom_call.1
$region0: #{tpu_custom_call.1}
  #allocation0 [shape = 'u32[]', space=smem, size = 0x4, offset = 0x4, fixed_abs, tag = 'smem constant byte address 0x4 - core index']
  #allocation1 [shape = 'u32[144,128]{1,0:T(1,128)}', space=vmem, size = 0x12000, scoped, tag = 'internal scratch']
  %s0 = inlined_call_operand.hbm [shape: f32[8,40], index: 0, kind: input, shape index: {}]
  %s1 = inlined_call_operand.hbm [shape: f32[40,512], index: 1, kind: input, shape index: {}]
  %s2 = inlined_call_operand.hbm [shape: f32[8,256], index: 2, kind: output, shape index: {}]
  %s3 = sld [smem:[#allocation0]]
  $region26: #{tpu_custom_call.1} parent=0
    _
  %s5 = ssub.s32 1, %s3
  %s6 = scalar_select 0, %s5, %s3
  $region1: #{tpu_custom_call.1} parent=0
    #allocation2 [shape = 'u8[4096]{0}', space=vmem, size = 0x1000, scoped, tag = 'input window, operand 0, single buffered']
    #allocation3 [shape = 's32[1]{0}', space=sflag, size = 0x4, scoped, tag = 'scoped memory for tpu_custom_call.1']
    #allocation4 [shape = 's32[1]{0}', space=sflag, size = 0x4, scoped, tag = 'scoped memory for tpu_custom_call.1']
    #allocation5 [shape = 'u8[81920]{0}', space=vmem, size = 0x14000, scoped, tag = 'input window, operand 1, single buffered']
    #allocation6 [shape = 's32[1]{0}', space=sflag, size = 0x4, scoped, tag = 'scoped memory for tpu_custom_call.1']
    #allocation7 [shape = 'u8[8192]{0}', space=vmem, size = 0x2000, scoped, tag = 'output window, operand 0, single buffered']
    %7 = vsyncpa [#allocation3], 0
    %8 = vsyncpa [#allocation6], 0
    %9 = vsyncpa [#allocation4], 0
    // Predicated region
    $region2: #{tpu_custom_call.1} parent=1 // pred_check
      _
    $region3: #{tpu_custom_call.1} parent=1 // pred_check_branch
      %11 = sbr.rel (0) target = $region5
    $region4: #{tpu_custom_call.1} parent=1 // pred_region
      %s13 = ssub.s32 128, 128
      %14 = vsyncadd [#allocation3], %s13
      %s16 = sshll.u32 [#allocation2], 4
      %s17 = int_to_ptr.vmem [resolvable:$true] %s16
      %19 = dma.hbm_to_vmem [thread:$0]  %s0, 128, %s17, [#allocation3]
    $region5: #{tpu_custom_call.1} parent=1 // pred_fallthru
      _
    // Predicated region
    $region6: #{tpu_custom_call.1} parent=1 // pred_check
      _
    $region7: #{tpu_custom_call.1} parent=1 // pred_check_branch
      %21 = sbr.rel (0) target = $region9
    $region8: #{tpu_custom_call.1} parent=1 // pred_region
      %s23 = ssub.s32 2560, 2560
      %24 = vsyncadd [#allocation6], %s23
      %s25 = sshll.u32 [#allocation5], 4
      %s26 = int_to_ptr.vmem [resolvable:$true] %s25
      %31 = dma.hbm_to_vmem [thread:$0]  %s1, 2560, %s26, [#allocation6], 512, 512, 32
    $region9: #{tpu_custom_call.1} parent=1 // pred_fallthru
      _
    // Predicated region
    $region10: #{tpu_custom_call.1} parent=1 // pred_check
      _
    $region11: #{tpu_custom_call.1} parent=1 // pred_check_branch
      %33 = sbr.rel (0) target = $region13
    $region12: #{tpu_custom_call.1} parent=1 // pred_region
      %34 = dma.done [#allocation3], 128
    $region13: #{tpu_custom_call.1} parent=1 // pred_fallthru
      _
    // Predicated region
    $region14: #{tpu_custom_call.1} parent=1 // pred_check
      _
    $region15: #{tpu_custom_call.1} parent=1 // pred_check_branch
      %36 = sbr.rel (0) target = $region17
    $region16: #{tpu_custom_call.1} parent=1 // pred_region
      %37 = dma.done [#allocation6], 2560
    $region17: #{tpu_custom_call.1} parent=1 // pred_fallthru
      _
    %v38 = vld [vmem:[#allocation2] sm:$0xff]
    %v39 = vld [vmem:[#allocation5] sm:$0xff]
    %v40 = vld [vmem:[#allocation5 + $0x8] sm:$0xff]
    %v41 = vld [vmem:[#allocation5 + $0x10] sm:$0xff]
    %v42 = vld [vmem:[#allocation5 + $0x18] sm:$0xff]
    %v43 = vld [vmem:[#allocation5 + $0x20] sm:$0xff]
    %v44 = vld [vmem:[#allocation5 + $0x28] sm:$0xff]
    %v45 = vld [vmem:[#allocation5 + $0x30] sm:$0xff]
    %v46 = vld [vmem:[#allocation5 + $0x38] sm:$0xff]
    %v47 = vld [vmem:[#allocation5 + $0x40] sm:$0xff]
    %v48 = vld [vmem:[#allocation5 + $0x48] sm:$0xff]
    %v49 = vld [vmem:[#allocation5 + $0x50] sm:$0xff]
    %v50 = vld [vmem:[#allocation5 + $0x58] sm:$0xff]
    %v51 = vld [vmem:[#allocation5 + $0x60] sm:$0xff]
    %v52 = vld [vmem:[#allocation5 + $0x68] sm:$0xff]
    %v53 = vld [vmem:[#allocation5 + $0x70] sm:$0xff]
    %v54 = vld [vmem:[#allocation5 + $0x78] sm:$0xff]
    %v55 = vld [vmem:[#allocation5 + $0x80] sm:$0xff]
    %v56 = vld [vmem:[#allocation5 + $0x88] sm:$0xff]
    %v57 = vld [vmem:[#allocation5 + $0x90] sm:$0xff]
    %v58 = vld [vmem:[#allocation5 + $0x98] sm:$0xff]
    %vm59 = vcmask 326656
    %v61 = vsel %vm59, %v38, 0
    %63 = vmatprep.subr.mxu0 %v40
    %64 = vmatpush1.msra.mxu0 %v39
    %65 = vmatprep.subr.mxu0 %v44
    %66 = vmatpush1.msra.mxu0 %v43
    %67 = vmatprep.subr.mxu0 %v48
    %68 = vmatpush1.msra.mxu0 %v47
    %69 = vmatprep.subr.mxu0 %v52
    %70 = vmatpush1.msra.mxu0 %v51
    %71 = vmatprep.subr.mxu0 %v56
    %72 = vmatpush1.msra.mxu0 %v55
    %73 = vmatprep.subr.mxu0 0.0
    %74 = vmatpush1.msra.mxu0 0.0
    %75 = vmatprep.subr.mxu0 0.0
    %76 = vmatpush1.msra.mxu0 0.0
    %77 = vmatprep.subr.mxu0 0.0
    %78 = vmatpush1.msra.mxu0 0.0
    %79 = vmatprep.subr.mxu0 0.0
    %80 = vmatpush1.msra.mxu0 0.0
    %81 = vmatprep.subr.mxu0 0.0
    %82 = vmatpush1.msra.mxu0 0.0
    %83 = vmatprep.subr.mxu0 0.0
    %84 = vmatpush1.msra.mxu0 0.0
    %85 = vmatprep.subr.mxu0 0.0
    %86 = vmatpush1.msra.mxu0 0.0
    %87 = vmatprep.subr.mxu0 0.0
    %88 = vmatpush1.msra.mxu0 0.0
    %89 = vmatprep.subr.mxu0 0.0
    %90 = vmatpush1.msra.mxu0 0.0
    %91 = vmatprep.subr.mxu0 0.0
    %92 = vmatpush1.msra.mxu0 0.0
    %93 = vmatprep.subr.mxu0 0.0
    %94 = vmatpush1.msra.mxu0 0.0
    %95 = vmatprep.subr.mxu0 0.0
    %96 = vmatpush1.msra.mxu0 0.0
    %97 = vmatprep.subr.mxu0 0.0
    %98 = vmatpush1.msra.mxu0 0.0
    %99 = vmatprep.subr.mxu0 0.0
    %100 = vmatpush1.msra.mxu0 0.0
    %101 = vmatprep.subr.mxu0 0.0
    %102 = vmatpush1.msra.mxu0 0.0
    %103 = vmatprep.subr.mxu0 0.0
    %104 = vmatpush1.msra.mxu0 0.0
    %105 = vmatprep.subr.mxu0 0.0
    %106 = vmatpush1.msra.mxu0 0.0
    %107 = vmatprep.subr.mxu0 0.0
    %108 = vmatpush1.msra.mxu0 0.0
    %109 = vmatprep.subr.mxu0 0.0
    %110 = vmatpush1.msra.mxu0 0.0
    %111 = vmatprep.subr.mxu0 0.0
    %112 = vmatpush1.msra.mxu0 0.0
    %113 = vmatprep.subr.mxu0 0.0
    %114 = vmatpush1.msra.mxu0 0.0
    %115 = vmatprep.subr.mxu0 0.0
    %116 = vmatpush1.msra.mxu0 0.0
    %117 = vmatprep.subr.mxu0 0.0
    %118 = vmatpush1.msra.mxu0 0.0
    %119 = vmatprep.subr.mxu0 0.0
    %120 = vmatpush1.msra.mxu0 0.0
    %121 = vmatprep.subr.mxu0 0.0
    %122 = vmatpush1.msra.mxu0 0.0
    %123 = vmatprep.subr.mxu0 0.0
    %124 = vmatpush1.msra.mxu0 0.0
    %125 = vmatprep.subr.mxu0 0.0
    %126 = vmatpush1.msra.mxu0 0.0
    %127 = vmatprep.mubr.f32.mxu0 0.0
    %128 = vmatmul.mubr.f32.gmra.mrb[0].mxu0 %v61
    %v129 = vpop.f32.mrb[0].mxu0
    %v130 = vadd.f32 0.0, %v129
    %v131 = vpop.f32.mrb[0].mxu0
    %v132 = vadd.f32 0.0, %v131
    %133 = vdwg.mxu0
    %134 = vmatprep.subr.mxu0 %v42
    %135 = vmatpush1.msra.mxu0 %v41
    %136 = vmatprep.subr.mxu0 %v46
    %137 = vmatpush1.msra.mxu0 %v45
    %138 = vmatprep.subr.mxu0 %v50
    %139 = vmatpush1.msra.mxu0 %v49
    %140 = vmatprep.subr.mxu0 %v54
    %141 = vmatpush1.msra.mxu0 %v53
    %142 = vmatprep.subr.mxu0 %v58
    %143 = vmatpush1.msra.mxu0 %v57
    %144 = vmatprep.subr.mxu0 0.0
    %145 = vmatpush1.msra.mxu0 0.0
    %146 = vmatprep.subr.mxu0 0.0
    %147 = vmatpush1.msra.mxu0 0.0
    %148 = vmatprep.subr.mxu0 0.0
    %149 = vmatpush1.msra.mxu0 0.0
    %150 = vmatprep.subr.mxu0 0.0
    %151 = vmatpush1.msra.mxu0 0.0
    %152 = vmatprep.subr.mxu0 0.0
    %153 = vmatpush1.msra.mxu0 0.0
    %154 = vmatprep.subr.mxu0 0.0
    %155 = vmatpush1.msra.mxu0 0.0
    %156 = vmatprep.subr.mxu0 0.0
    %157 = vmatpush1.msra.mxu0 0.0
    %158 = vmatprep.subr.mxu0 0.0
    %159 = vmatpush1.msra.mxu0 0.0
    %160 = vmatprep.subr.mxu0 0.0
    %161 = vmatpush1.msra.mxu0 0.0
    %162 = vmatprep.subr.mxu0 0.0
    %163 = vmatpush1.msra.mxu0 0.0
    %164 = vmatprep.subr.mxu0 0.0
    %165 = vmatpush1.msra.mxu0 0.0
    %166 = vmatprep.subr.mxu0 0.0
    %167 = vmatpush1.msra.mxu0 0.0
    %168 = vmatprep.subr.mxu0 0.0
    %169 = vmatpush1.msra.mxu0 0.0
    %170 = vmatprep.subr.mxu0 0.0
    %171 = vmatpush1.msra.mxu0 0.0
    %172 = vmatprep.subr.mxu0 0.0
    %173 = vmatpush1.msra.mxu0 0.0
    %174 = vmatprep.subr.mxu0 0.0
    %175 = vmatpush1.msra.mxu0 0.0
    %176 = vmatprep.subr.mxu0 0.0
    %177 = vmatpush1.msra.mxu0 0.0
    %178 = vmatprep.subr.mxu0 0.0
    %179 = vmatpush1.msra.mxu0 0.0
    %180 = vmatprep.subr.mxu0 0.0
    %181 = vmatpush1.msra.mxu0 0.0
    %182 = vmatprep.subr.mxu0 0.0
    %183 = vmatpush1.msra.mxu0 0.0
    %184 = vmatprep.subr.mxu0 0.0
    %185 = vmatpush1.msra.mxu0 0.0
    %186 = vmatprep.subr.mxu0 0.0
    %187 = vmatpush1.msra.mxu0 0.0
    %188 = vmatprep.subr.mxu0 0.0
    %189 = vmatpush1.msra.mxu0 0.0
    %190 = vmatprep.subr.mxu0 0.0
    %191 = vmatpush1.msra.mxu0 0.0
    %192 = vmatprep.subr.mxu0 0.0
    %193 = vmatpush1.msra.mxu0 0.0
    %194 = vmatprep.subr.mxu0 0.0
    %195 = vmatpush1.msra.mxu0 0.0
    %196 = vmatprep.subr.mxu0 0.0
    %197 = vmatpush1.msra.mxu0 0.0
    %198 = vmatprep.mubr.f32.mxu0 0.0
    %199 = vmatmul.mubr.f32.gmra.mrb[0].mxu0 %v61
    %v200 = vpop.f32.mrb[0].mxu0
    %v201 = vadd.f32 0.0, %v200
    %v202 = vpop.f32.mrb[0].mxu0
    %v203 = vadd.f32 0.0, %v202
    %204 = vdwg.mxu0
    %v205 = vmul.f32 %v130, %v201
    %v206 = vmul.f32 %v132, %v203
    %207 = vst [vmem:[#allocation7] sm:$0xff] %v205
    %208 = vst [vmem:[#allocation7 + $0x8] sm:$0xff] %v206
    // Predicated region
    $region18: #{tpu_custom_call.1} parent=1 // pred_check
      _
    $region19: #{tpu_custom_call.1} parent=1 // pred_check_branch
      %210 = sbr.rel (0) target = $region21
    $region20: #{tpu_custom_call.1} parent=1 // pred_region
      %s212 = ssub.s32 256, 256
      %213 = vsyncadd [#allocation4], %s212
      %s215 = sshll.u32 [#allocation7], 4
      %s216 = int_to_ptr.vmem [resolvable:$true] %s215
      %218 = dma.vmem_to_hbm [thread:$0]  %s216, 256, %s2, [#allocation4]
    $region21: #{tpu_custom_call.1} parent=1 // pred_fallthru
      _
    // Predicated region
    $region22: #{tpu_custom_call.1} parent=1 // pred_check
      _
    $region23: #{tpu_custom_call.1} parent=1 // pred_check_branch
      %220 = sbr.rel (0) target = $region25
    $region24: #{tpu_custom_call.1} parent=1 // pred_region
      %221 = dma.done [#allocation4], 256
    $region25: #{tpu_custom_call.1} parent=1 // pred_fallthru
      _
    %222 = vsyncpa [#allocation3], 1
    %223 = vsyncpa [#allocation6], 1
    %224 = vsyncpa [#allocation4], 1

</llo_original>
